<compile_context>
chip_gen: v6e
topology: v6e:2x2x1
jax: 0.10.0
libtpu: 0.0.40
codegen_flags: <defaults>
</compile_context>

<pallas_src>
import math
from functools import partial

import numpy as np
import jax
import jax.numpy as jnp
from jax.experimental import pallas as pl
from jax.experimental.pallas import tpu as pltpu

N_CLASSES = 20
N_ANCHORS = 3
ANCHORS = np.array([[[80., 80.], [60., 60.], [50., 50.]],
                    [[70., 70.], [50., 50.], [40., 40.]],
                    [[60., 60.], [40., 40.], [30., 30.]]], dtype=np.float32)
STRIDES = np.array([32., 16., 8.], dtype=np.float32)
EPS = 1e-9
_LANE = 128
_NEG_BIG = -1e9          # softplus(-1e9) == 0 exactly (f32 and bf16)
_TNT = 512               # per-target kernel lane chunk (bounds vreg live ranges)


def _round_up(x, m):
    return ((x + m - 1) // m) * m


def _cdiv(a, b):
    return -(-a // b)


# ----------------------------- in-kernel helpers -----------------------------

def _softplus(x):
    # log(1 + exp(x)), numerically stable
    return jnp.maximum(x, 0.0) + jnp.log(1.0 + jnp.exp(-jnp.abs(x)))


def _softplus_neg(x):
    # log(1 + exp(-x)), numerically stable
    return jnp.maximum(-x, 0.0) + jnp.log(1.0 + jnp.exp(-jnp.abs(x)))


def _atan(x):
    """Elementwise arctan (Cephes atanf range reduction + polynomial), built from
    mul/add/abs/where/div so it always lowers on Mosaic."""
    sgn = jnp.where(x < 0.0, -1.0, 1.0)
    a = jnp.abs(x)
    big = a > 2.414213562373095       # tan(3*pi/8)
    mid = a > 0.4142135623730951      # tan(pi/8)
    safe_a = jnp.maximum(a, 1.0)      # floor only matters on discarded lanes
    xr = jnp.where(big, -1.0 / safe_a, jnp.where(mid, (a - 1.0) / (a + 1.0), a))
    base = jnp.where(big, math.pi / 2.0, jnp.where(mid, math.pi / 4.0, 0.0))
    z = xr * xr
    poly = (((8.05374449538e-2 * z - 1.38776856032e-1) * z
             + 1.99777106478e-1) * z - 3.33329491539e-1) * z * xr + xr
    return sgn * (base + poly)


# ------------------------------ Pallas kernels --------------------------------

def _per_target_kernel(p_ref, t_ref, c_ref, sums_ref):
    """Per-target losses for a 512-lane chunk of targets (all pyramid levels batched),
    feature-major layout; the (1, 8) output block is the resident accumulator.

    p_ref : (5+nc, tnt) gathered raw predictions (rows 0-1 xy, 2-3 wh, 4 obj, 5.. cls)
    t_ref : (16,   tnt) rows 0-7 : tbox xy, tbox wh, anchors, gij
                        rows 8-15: pair-swapped target centers, w_xy, w_cos, w_box,
                                   w_cls, w_obj (dedup/N_level), pad
    c_ref : (nc,   tnt) one-hot class targets
    Padded targets carry zero weights, so they contribute nothing.
    """
    step = pl.program_id(0)

    @pl.when(step == 0)
    def _():
        sums_ref[...] = jnp.zeros_like(sums_ref)

    nc = c_ref.shape[0]

    # Read fields straight off the refs (grouped 8-row layout; avoids materialising
    # the full (16, tnt) block in vregs and re-slicing it).
    xy_l = p_ref[0:2, :]
    wh_l = p_ref[2:4, :]
    obj_l = p_ref[4:5, :]
    cls_l = p_ref[5:5 + nc, :]

    tb_xy = t_ref[0:2, :]
    tw = t_ref[2:3, :]
    th = t_ref[3:4, :]
    an = t_ref[4:6, :]
    gxy = t_ref[6:8, :]
    tsw = t_ref[8:10, :]
    w_xy = t_ref[10:11, :]
    w_cos = t_ref[11:12, :]
    w_box = t_ref[12:13, :]
    w_cls = t_ref[13:14, :]
    w_obj = t_ref[14:15, :]
    t1h = c_ref[...]

    # ---- lxy : BCELoss(sigmoid(xy_l), tb_xy) in logits form ----
    lxy = jnp.sum(w_xy * (_softplus_neg(xy_l) + (1.0 - tb_xy) * xy_l), keepdims=True)

    pxy = jax.nn.sigmoid(xy_l)
    # note: exp() is unclamped to match the reference (untrusted huge logits can overflow)
    pwh = jnp.exp(wh_l) * an

    px = pxy[0:1, :]; py = pxy[1:2, :]
    tx = tb_xy[0:1, :]; ty = tb_xy[1:2, :]
    gx = gxy[0:1, :]; gy = gxy[1:2, :]
    t_x2 = tsw[0:1, :]; t_y2 = tsw[1:2, :]

    # ---- bbox_cos (x1y1x2y2=False); exact division (correctness-review request) ----
    t_x1 = tx + gx; t_y1 = ty + gy
    p_x1 = px + gx; p_y1 = py + gy
    tvx = t_x1 - t_x2; tvy = t_y1 - t_y2
    pvx = p_x1 - t_x2; pvy = p_y1 - t_y2
    alph1 = jnp.sqrt(tvx * tvx + tvy * tvy)
    alph2 = jnp.sqrt(pvx * pvx + pvy * pvy)
    at = _atan((alph1 - alph2) / jnp.maximum(alph1, EPS))
    vcos = (4.0 / (math.pi ** 2)) * at * at
    cosv = (pvx * tvx + pvy * tvy) / jnp.maximum(alph1 * alph2, EPS)
    lcos = jnp.sum(w_cos * (1.0 - (cosv - vcos)), keepdims=True)

    # ---- bbox_iou (CIoU, x1y1x2y2=False) ----
    pw = pwh[0:1, :]; ph = pwh[1:2, :]
    b1x1 = px - pw * 0.5; b1x2 = px + pw * 0.5
    b1y1 = py - ph * 0.5; b1y2 = py + ph * 0.5
    b2x1 = tx - tw * 0.5; b2x2 = tx + tw * 0.5
    b2y1 = ty - th * 0.5; b2y2 = ty + th * 0.5
    inter = (jnp.maximum(jnp.minimum(b1x2, b2x2) - jnp.maximum(b1x1, b2x1), 0.0) *
             jnp.maximum(jnp.minimum(b1y2, b2y2) - jnp.maximum(b1y1, b2y1), 0.0))
    w1 = b1x2 - b1x1; h1 = b1y2 - b1y1 + EPS
    w2 = b2x2 - b2x1; h2 = b2y2 - b2y1 + EPS
    union = w1 * h1 + w2 * h2 - inter + EPS
    iou = inter / union
    small = jnp.where(w1 * h1 < 0.25 * w2 * h2, 1.0, 0.0)
    ipp = inter / (0.25 * w2 * h2 * small + w1 * h1 * (1.0 - small) + EPS)
    cw = jnp.maximum(b1x2, b2x2) - jnp.minimum(b1x1, b2x1)
    chh = jnp.maximum(b1y2, b2y2) - jnp.minimum(b1y1, b2y1)
    c2 = cw * cw + chh * chh + EPS
    dxs = b2x1 + b2x2 - b1x1 - b1x2
    dys = b2y1 + b2y2 - b1y1 - b1y2
    rho2 = (dxs * dxs + dys * dys) * 0.25
    dv = _atan(w2 / h2) - _atan(w1 / h1)
    v = (4.0 / (math.pi ** 2)) * dv * dv
    alpha = v / (1.0 + EPS - iou + v)
    ciou = ipp - (rho2 / c2 + v * alpha)
    lbox = jnp.sum(w_box * (1.0 - ciou), keepdims=True)

    # ---- lcls : BCEWithLogits(pos_weight=5) ----
    lcls = jnp.sum(w_cls * ((1.0 - t1h) * cls_l + (1.0 + 4.0 * t1h) * _softplus_neg(cls_l)),
                   keepdims=True)

    # ---- objectness positive-cell correction (pos_weight=10) ----
    #   full(y=iou+) - base(y=0) = iou+ * (9*softplus(-x) - x)
    iou_pos = jnp.maximum(ciou, 0.0)
    lobj_c = jnp.sum(w_obj * iou_pos * (9.0 * _softplus_neg(obj_l) - obj_l), keepdims=True)

    col = jax.lax.broadcasted_iota(jnp.int32, (1, 8), 1)
    partial_sums = (jnp.where(col == 0, lxy, 0.0) + jnp.where(col == 1, lcos, 0.0) +
                    jnp.where(col == 2, lbox, 0.0) + jnp.where(col == 3, lcls, 0.0) +
                    jnp.where(col == 4, lobj_c, 0.0))
    sums_ref[...] = sums_ref[...] + partial_sums


def _obj_base_kernel(scale_ref, x_ref, out_ref, *, n_groups):
    """Fused objectness base loss:  sum over tiles of (1/N_level[row]) * softplus(x).

    scale_ref : (block_rows, 1)   f32 per-row inverse counts (0 for pure-pad rows)
    x_ref     : (block_rows, 128) obj logits, NATIVE dtype (cast per 8-row slice)
    out_ref   : (8, 128)          resident per-core partial; reduced only in epilogue
    """
    t = pl.program_id(1)

    @pl.when(t == 0)
    def _():
        out_ref[...] = jnp.zeros_like(out_ref)

    def group_contrib(lo):
        xr = x_ref[lo, :].astype(jnp.float32)
        sr = scale_ref[lo, :]
        return sr * _softplus(xr)

    if n_groups <= 32:
        # small tile (and the path exercised by the demo): static unrolled slices
        part = jnp.zeros((8, _LANE), jnp.float32)
        for r in range(n_groups):
            part = part + group_contrib(slice(r * 8, (r + 1) * 8))
    else:
        # large tile: vreg-carried partial, 8-row dynamic slices (bounded live ranges)
        def body(r, part):
            off = pl.multiple_of(r * 8, 8)
            return part + group_contrib(pl.ds(off, 8))
        part = jax.lax.fori_loop(0, n_groups, body,
                                 jnp.zeros((8, _LANE), jnp.float32))

    out_ref[...] = out_ref[...] + part

    @pl.when(t == pl.num_programs(1) - 1)
    def _():
        # single cross-lane reduce in the epilogue
        out_ref[...] = jnp.zeros_like(out_ref) + jnp.sum(out_ref[...])


# ------------------------------- kernel wrappers -------------------------------

def per_target_losses(P, TF, CL):
    """P (C, NTpad), TF (16, NTpad), CL (nc, NTpad) -> (1, 8) loss sums."""
    C, NTpad = P.shape
    nc = CL.shape[0]
    tnt = min(_TNT, NTpad)
    assert NTpad % tnt == 0
    nsteps = NTpad // tnt

    cost = pl.CostEstimate(flops=400 * NTpad, transcendentals=30 * NTpad,
                           bytes_accessed=4 * NTpad * (C + 16 + nc) + 64)

    return pl.pallas_call(
        _per_target_kernel,
        out_shape=jax.ShapeDtypeStruct((1, 8), jnp.float32),
        grid_spec=pltpu.PrefetchScalarGridSpec(
            num_scalar_prefetch=0,
            grid=(nsteps,),
            in_specs=[pl.BlockSpec((C, tnt), lambda i: (0, i)),
                      pl.BlockSpec((16, tnt), lambda i: (0, i)),
                      pl.BlockSpec((nc, tnt), lambda i: (0, i))],
            out_specs=pl.BlockSpec((1, 8), lambda i: (0, 0))),
        compiler_params=pltpu.CompilerParams(dimension_semantics=("arbitrary",)),
        cost_estimate=cost,
    )(P, TF, CL)


def fused_obj_base_loss(obj_levels, max_block_rows=1024):
    """sum_i mean(softplus(obj_logits_i)) over pyramid levels, one fused kernel.

    obj_levels are the channel-4 slices in their NATIVE dtype (no full-tensor f32
    cast).  Each level is padded only to a 128-lane row with -1e9 (softplus == 0);
    a per-row f32 inverse-count column carries 1/N_level, so tiles may span level
    boundaries (no per-level tile padding waste).  Leading size-2 'parallel' grid
    axis -> per-core partial sums on v7x megacore (harmless serial loop otherwise).
    """
    # TODO(synk): the residual concat below is one small pass over the already
    # compacted obj stream (~1/C of the head tensor); eliminating it entirely needs
    # a manual-DMA (pl.ANY) multi-input kernel.
    parts, scale_rows = [], []
    for x in obj_levels:
        n = int(x.size)
        rows = _cdiv(n, _LANE)
        pad = rows * _LANE - n
        if pad:
            x = jnp.pad(x, (0, pad), constant_values=_NEG_BIG)
        parts.append(x)
        scale_rows.append(np.full(rows, 1.0 / n, np.float32))

    total_rows = sum(s.shape[0] for s in scale_rows)
    block_rows = int(min(max_block_rows, _round_up(_cdiv(total_rows, 2), 8)))
    tiles_per_core = _cdiv(total_rows, 2 * block_rows)
    padded_rows = 2 * tiles_per_core * block_rows
    extra = padded_rows - total_rows
    if extra:
        parts.append(jnp.full((extra * _LANE,), _NEG_BIG, parts[0].dtype))
        scale_rows.append(np.zeros(extra, np.float32))    # scale 0 -> no contribution

    flat = jnp.concatenate(parts).reshape(padded_rows, _LANE)        # native dtype
    scale = jnp.asarray(np.concatenate(scale_rows)[:, None])         # (rows, 1) f32

    n_groups = block_rows // 8
    elems = padded_rows * _LANE
    cost = pl.CostEstimate(
        flops=8 * elems, transcendentals=2 * elems,
        bytes_accessed=elems * flat.dtype.itemsize + padded_rows * 4 + 16 * _LANE * 4)

    partials = pl.pallas_call(
        partial(_obj_base_kernel, n_groups=n_groups),
        out_shape=jax.ShapeDtypeStruct((16, _LANE), jnp.float32),
        grid_spec=pltpu.PrefetchScalarGridSpec(
            num_scalar_prefetch=0,
            grid=(2, tiles_per_core),
            in_specs=[pl.BlockSpec((block_rows, 1),
                                   lambda c, t: (c * tiles_per_core + t, 0)),
                      pl.BlockSpec((block_rows, _LANE),
                                   lambda c, t: (c * tiles_per_core + t, 0))],
            out_specs=pl.BlockSpec((8, _LANE), lambda c, t: (c, 0))),
        compiler_params=pltpu.CompilerParams(
            dimension_semantics=("parallel", "arbitrary")),
        cost_estimate=cost,
    )(scale, flat)
    return partials[0, 0] + partials[8, 0]


# ------------------------------- glue (host side) -------------------------------

def build_target_np(pred_shapes, targets):
    """Replicates MeasureLoss.build_target with concrete numpy (dynamic-shape glue).
    Note: matches the reference's whole-anchor-row filter (j.sum(dim=1) > 1)."""
    na, nt = 3, targets.shape[0]
    ai = np.tile(np.arange(na, dtype=np.float32).reshape(na, 1), (1, nt))
    gain = np.ones(7, dtype=np.float32)
    tg = np.concatenate([np.tile(targets[None].astype(np.float32), (na, 1, 1)),
                         ai[:, :, None]], axis=2)                      # (na, nt, 7)
    tcls, tbox, indices, anch, grid_xy = [], [], [], [], []
    for i in range(na):
        shape = pred_shapes[i]                                         # (B, A, H, W, C)
        anchs = (ANCHORS[i] / STRIDES[i]).astype(np.float32)           # (3, 2)
        gain[2:6] = np.array([shape[3], shape[2], shape[3], shape[2]], np.float32)
        t = tg * gain
        if nt:
            r = t[:, :, 4:6] / anchs[:, None, :]
            j = np.maximum(r, 1.0 / r).max(axis=2) < 6.0               # (na, nt)
            t = t[j.sum(axis=1) > 1].reshape(-1, 7)
        else:
            t = tg[0]
        b = t[:, 0].astype(np.int64)
        c = t[:, 1].astype(np.int64)
        gxy = t[:, 2:4]
        gwh = t[:, 4:6]
        a = t[:, 6].astype(np.int64)
        gij = gxy.astype(np.int64)
        gi = np.clip(gij[:, 0], 0, shape[3] - 1)
        gj = np.clip(gij[:, 1], 0, shape[2] - 1)
        gij = np.stack([gi, gj], axis=1)            # torch clamp_ is in-place on gij
        indices.append((b, a, gj, gi))
        tbox.append(np.concatenate([gxy - gij.astype(np.float32), gwh], 1).astype(np.float32))
        anch.append(anchs[a].astype(np.float32))
        tcls.append(c)
        grid_xy.append(gij)
    return tcls, tbox, indices, anch, grid_xy


def measure_loss_forward(outputs, targets_np):
    pred_shapes = [tuple(o.shape) for o in outputs]
    tcls, tbox, indices, anchors, grid_xy = build_target_np(pred_shapes, targets_np)

    C = pred_shapes[0][4]
    nc = C - 5
    zero = jnp.zeros((), jnp.float32)

    # ---------- per-target features, batched over all pyramid levels ----------
    ps_list, feat_list, cls_list = [], [], []
    for i in range(3):
        out_i = outputs[i]                                  # NATIVE dtype, no full cast
        B, A, H, W, _ = out_i.shape
        b, a, gj, gi = indices[i]
        nt = int(b.shape[0])
        if nt == 0:
            continue
        # The reference bbox_cos pairing (aain) itself requires an even count per level.
        assert nt % 2 == 0, "bbox_cos pairing requires an even number of targets"
        # small XLA gather, cast only the gathered (nt, C) cells to f32
        ps_list.append(out_i[b, a, gj, gi].astype(jnp.float32))

        tb = tbox[i]                                        # (nt, 4)
        an = anchors[i]                                     # (nt, 2)
        gijf = grid_xy[i].astype(np.float32)                # (nt, 2)
        txy = tb[:, :2] + gijf
        aain = np.arange(nt)
        aain = aain + 1 - 2 * (aain % 2)                    # [1,0,3,2,...]
        tsw = txy[aain]                                     # pair-swapped target centers

        # last-write-wins mask for duplicated cells (PyTorch scatter semantics)
        lin = ((b * A + a) * H + gj) * W + gi
        last = np.zeros(nt, np.float32)
        _, ridx = np.unique(lin[::-1], return_index=True)
        last[nt - 1 - ridx] = 1.0

        w_xy = np.full(nt, 1.0 / (2.0 * nt), np.float32)
        w_cos = np.full(nt, 1.0 / nt, np.float32)
        w_box = np.full(nt, 1.0 / nt, np.float32)
        w_cls = (np.full(nt, 1.0 / (nt * nc), np.float32) if nc > 1
                 else np.zeros(nt, np.float32))
        w_obj = (last / float(B * A * H * W)).astype(np.float32)

        # rows 0-7 and 8-15 grouped so related fields share 8-row sublane tiles
        feat_list.append(np.stack(
            [tb[:, 0], tb[:, 1], tb[:, 2], tb[:, 3],
             an[:, 0], an[:, 1], gijf[:, 0], gijf[:, 1],
             tsw[:, 0], tsw[:, 1],
             w_xy, w_cos, w_box, w_cls, w_obj,
             np.zeros(nt, np.float32)], axis=0).astype(np.float32))   # (16, nt)

        onehot = np.zeros((nc, nt), np.float32)
        onehot[tcls[i], np.arange(nt)] = 1.0
        cls_list.append(onehot)

    if ps_list:
        NT = sum(f.shape[1] for f in feat_list)
        NTpad = _round_up(NT, _LANE) if NT <= _TNT else _round_up(NT, _TNT)
        P = jnp.concatenate(ps_list, axis=0).T              # (C, NT) layout plumbing
        P = jnp.pad(P, ((0, 0), (0, NTpad - NT)))
        TF = np.pad(np.concatenate(feat_list, axis=1), ((0, 0), (0, NTpad - NT)))
        CL = np.pad(np.concatenate(cls_list, axis=1), ((0, 0), (0, NTpad - NT)))
        sums = per_target_losses(P, jnp.asarray(TF), jnp.asarray(CL))
        lxy, lcos, lbox = sums[0, 0], sums[0, 1], sums[0, 2]
        lcls = sums[0, 3]
        lobj_corr = sums[0, 4]
    else:
        lxy = lcos = lbox = lcls = lobj_corr = zero

    # ---------- objectness loss: fused softplus reduction over all levels ----------
    obj_levels = [outputs[i][..., 4].reshape(-1) for i in range(3)]   # native dtype
    lobj = fused_obj_base_loss(obj_levels) + lobj_corr

    lbox = lbox * 0.5
    lcos = lcos * 0.2
    lobj = lobj * 1.0
    lcls = lcls * 0.5
    loss = lobj + lcls + lcos + lbox
    return loss, [lcos, lobj, lcls, lbox, lxy, loss]


# ------------------------------------ main --------------------------------------

if __name__ == "__main__":
    key = jax.random.PRNGKey(0)
    B = 2
    grids = [8, 16, 32]                   # small H=W per pyramid level (strides 32/16/8)
    C = 5 + N_CLASSES
    keys = jax.random.split(key, 3)
    outputs = [0.1 * jax.random.normal(keys[i], (B, N_ANCHORS, g, g, C), jnp.float32)
               for i, g in enumerate(grids)]

    # targets: (nt, 6) = [img_idx, class, x, y, w, h] (normalized), nt even
    targets = np.array([[0,  3, 0.25, 0.25, 0.30, 0.30],
                        [0,  7, 0.60, 0.40, 0.30, 0.30],
                        [1,  1, 0.35, 0.70, 0.30, 0.30],
                        [1, 12, 0.80, 0.80, 0.30, 0.30]], dtype=np.float32)

    loss, comps = measure_loss_forward(outputs, targets)
    loss = jax.block_until_ready(loss)
    comps = [jax.block_until_ready(c) for c in comps]
    assert np.isfinite(float(loss)), "loss is not finite"
    print("KERNEL_OK")
</pallas_src>

<mosaic_0001>
module attributes {stable_mosaic.version = 11 : i64} {
  func.func @_per_target_kernel(%arg0: i32, %arg1: memref<25x128xf32, #tpu.memory_space<vmem>>, %arg2: memref<16x128xf32, #tpu.memory_space<vmem>>, %arg3: memref<20x128xf32, #tpu.memory_space<vmem>>, %arg4: memref<1x8xf32, #tpu.memory_space<vmem>>) attributes {dimension_semantics = [#tpu.dimension_semantics<arbitrary>], iteration_bounds = array<i64: 1>, scalar_prefetch = 0 : i64, scratch_operands = 0 : i64, tpu.core_type = #tpu.core_type<tc>, window_params = [{transform_indices = @transform_0, window_bounds = array<i64: 25, 128>}, {transform_indices = @transform_1, window_bounds = array<i64: 16, 128>}, {transform_indices = @transform_2, window_bounds = array<i64: 20, 128>}, {pipeline_mode = #tpu.pipeline_mode<synchronous>, transform_indices = @transform_3, window_bounds = array<i64: 1, 8>}]} {
    %c0_i32 = arith.constant 0 : i32
    %0 = arith.cmpi eq, %arg0, %c0_i32 : i32
    %1 = arith.extui %0 : i1 to i32
    %c0_i32_0 = arith.constant 0 : i32
    %2 = arith.cmpi ne, %1, %c0_i32_0 : i32
    scf.if %2 {
      %cst_130 = arith.constant 0.000000e+00 : f32
      %428 = vector.broadcast %cst_130 : f32 to vector<1x8xf32>
      %c0_131 = arith.constant 0 : index
      %c0_132 = arith.constant 0 : index
      %429 = vector.load %arg4[%c0_131, %c0_132] : memref<1x8xf32, #tpu.memory_space<vmem>>, vector<1x8xf32>
      tpu.vector_store %arg4[%c0_131, %c0_132], %428 {strides = array<i32>} : memref<1x8xf32, #tpu.memory_space<vmem>>, vector<1x8xf32>,
    } else {
    }
    %c0 = arith.constant 0 : index
    %c0_1 = arith.constant 0 : index
    %3 = vector.load %arg1[%c0, %c0_1] : memref<25x128xf32, #tpu.memory_space<vmem>>, vector<2x128xf32>
    %c2 = arith.constant 2 : index
    %c0_2 = arith.constant 0 : index
    %4 = vector.load %arg1[%c2, %c0_2] : memref<25x128xf32, #tpu.memory_space<vmem>>, vector<2x128xf32>
    %c4 = arith.constant 4 : index
    %c0_3 = arith.constant 0 : index
    %5 = vector.load %arg1[%c4, %c0_3] : memref<25x128xf32, #tpu.memory_space<vmem>>, vector<1x128xf32>
    %c5 = arith.constant 5 : index
    %c0_4 = arith.constant 0 : index
    %6 = vector.load %arg1[%c5, %c0_4] : memref<25x128xf32, #tpu.memory_space<vmem>>, vector<20x128xf32>
    %c0_5 = arith.constant 0 : index
    %c0_6 = arith.constant 0 : index
    %7 = vector.load %arg2[%c0_5, %c0_6] : memref<16x128xf32, #tpu.memory_space<vmem>>, vector<2x128xf32>
    %c2_7 = arith.constant 2 : index
    %c0_8 = arith.constant 0 : index
    %8 = vector.load %arg2[%c2_7, %c0_8] : memref<16x128xf32, #tpu.memory_space<vmem>>, vector<1x128xf32>
    %c3 = arith.constant 3 : index
    %c0_9 = arith.constant 0 : index
    %9 = vector.load %arg2[%c3, %c0_9] : memref<16x128xf32, #tpu.memory_space<vmem>>, vector<1x128xf32>
    %c4_10 = arith.constant 4 : index
    %c0_11 = arith.constant 0 : index
    %10 = vector.load %arg2[%c4_10, %c0_11] : memref<16x128xf32, #tpu.memory_space<vmem>>, vector<2x128xf32>
    %c6 = arith.constant 6 : index
    %c0_12 = arith.constant 0 : index
    %11 = vector.load %arg2[%c6, %c0_12] : memref<16x128xf32, #tpu.memory_space<vmem>>, vector<2x128xf32>
    %c8 = arith.constant 8 : index
    %c0_13 = arith.constant 0 : index
    %12 = vector.load %arg2[%c8, %c0_13] : memref<16x128xf32, #tpu.memory_space<vmem>>, vector<2x128xf32>
    %c10 = arith.constant 10 : index
    %c0_14 = arith.constant 0 : index
    %13 = vector.load %arg2[%c10, %c0_14] : memref<16x128xf32, #tpu.memory_space<vmem>>, vector<1x128xf32>
    %c11 = arith.constant 11 : index
    %c0_15 = arith.constant 0 : index
    %14 = vector.load %arg2[%c11, %c0_15] : memref<16x128xf32, #tpu.memory_space<vmem>>, vector<1x128xf32>
    %c12 = arith.constant 12 : index
    %c0_16 = arith.constant 0 : index
    %15 = vector.load %arg2[%c12, %c0_16] : memref<16x128xf32, #tpu.memory_space<vmem>>, vector<1x128xf32>
    %c13 = arith.constant 13 : index
    %c0_17 = arith.constant 0 : index
    %16 = vector.load %arg2[%c13, %c0_17] : memref<16x128xf32, #tpu.memory_space<vmem>>, vector<1x128xf32>
    %c14 = arith.constant 14 : index
    %c0_18 = arith.constant 0 : index
    %17 = vector.load %arg2[%c14, %c0_18] : memref<16x128xf32, #tpu.memory_space<vmem>>, vector<1x128xf32>
    %c0_19 = arith.constant 0 : index
    %c0_20 = arith.constant 0 : index
    %18 = vector.load %arg3[%c0_19, %c0_20] : memref<20x128xf32, #tpu.memory_space<vmem>>, vector<20x128xf32>
    %cst = arith.constant 0.000000e+00 : f32
    %19 = vector.broadcast %cst : f32 to vector<2x128xf32>
    %20 = arith.subf %19, %3 : vector<2x128xf32>
    %cst_21 = arith.constant 0.000000e+00 : f32
    %21 = vector.broadcast %cst_21 : f32 to vector<2x128xf32>
    %22 = arith.maximumf %20, %21 : vector<2x128xf32>
    %23 = math.absf %3 : vector<2x128xf32>
    %cst_22 = arith.constant 0.000000e+00 : f32
    %24 = vector.broadcast %cst_22 : f32 to vector<2x128xf32>
    %25 = arith.subf %24, %23 : vector<2x128xf32>
    %26 = math.exp %25 : vector<2x128xf32>
    %cst_23 = arith.constant 1.000000e+00 : f32
    %27 = vector.broadcast %cst_23 : f32 to vector<2x128xf32>
    %28 = arith.addf %27, %26 : vector<2x128xf32>
    %29 = math.log %28 : vector<2x128xf32>
    %30 = arith.addf %22, %29 : vector<2x128xf32>
    %cst_24 = arith.constant 1.000000e+00 : f32
    %31 = vector.broadcast %cst_24 : f32 to vector<2x128xf32>
    %32 = arith.subf %31, %7 : vector<2x128xf32>
    %33 = arith.mulf %32, %3 : vector<2x128xf32>
    %34 = arith.addf %30, %33 : vector<2x128xf32>
    %35 = vector.broadcast %13 : vector<1x128xf32> to vector<2x128xf32>
    %36 = arith.mulf %35, %34 : vector<2x128xf32>
    %37 = vector.shape_cast %36 : vector<2x128xf32> to vector<1x2x128xf32>
    %cst_25 = arith.constant dense<0.000000e+00> : vector<1xf32>
    %38 = vector.multi_reduction <add>, %37, %cst_25 [1, 2] : vector<1x2x128xf32> to vector<1xf32>
    %39 = vector.shape_cast %38 : vector<1xf32> to vector<1x1x1xf32>
    %40 = vector.extract %39[0, 0, 0] : f32 from vector<1x1x1xf32>
    %41 = vector.broadcast %40 : f32 to vector<1x1xf32>
    %42 = arith.negf %3 : vector<2x128xf32>
    %43 = math.exp %42 : vector<2x128xf32>
    %cst_26 = arith.constant 1.000000e+00 : f32
    %44 = vector.broadcast %cst_26 : f32 to vector<2x128xf32>
    %45 = arith.addf %44, %43 : vector<2x128xf32>
    %46 = arith.divf %44, %45 : vector<2x128xf32>
    %47 = math.exp %4 : vector<2x128xf32>
    %48 = arith.mulf %47, %10 : vector<2x128xf32>
    %49 = vector.extract_strided_slice %46 {offsets = [0, 0], sizes = [1, 128], strides = [1, 1]} : vector<2x128xf32> to vector<1x128xf32>
    %50 = vector.extract_strided_slice %46 {offsets = [1, 0], sizes = [1, 128], strides = [1, 1]} : vector<2x128xf32> to vector<1x128xf32>
    %51 = vector.extract_strided_slice %7 {offsets = [0, 0], sizes = [1, 128], strides = [1, 1]} : vector<2x128xf32> to vector<1x128xf32>
    %52 = vector.extract_strided_slice %7 {offsets = [1, 0], sizes = [1, 128], strides = [1, 1]} : vector<2x128xf32> to vector<1x128xf32>
    %53 = vector.extract_strided_slice %11 {offsets = [0, 0], sizes = [1, 128], strides = [1, 1]} : vector<2x128xf32> to vector<1x128xf32>
    %54 = vector.extract_strided_slice %11 {offsets = [1, 0], sizes = [1, 128], strides = [1, 1]} : vector<2x128xf32> to vector<1x128xf32>
    %55 = vector.extract_strided_slice %12 {offsets = [0, 0], sizes = [1, 128], strides = [1, 1]} : vector<2x128xf32> to vector<1x128xf32>
    %56 = vector.extract_strided_slice %12 {offsets = [1, 0], sizes = [1, 128], strides = [1, 1]} : vector<2x128xf32> to vector<1x128xf32>
    %57 = arith.addf %51, %53 : vector<1x128xf32>
    %58 = arith.addf %52, %54 : vector<1x128xf32>
    %59 = arith.addf %49, %53 : vector<1x128xf32>
    %60 = arith.addf %50, %54 : vector<1x128xf32>
    %61 = arith.subf %57, %55 : vector<1x128xf32>
    %62 = arith.subf %58, %56 : vector<1x128xf32>
    %63 = arith.subf %59, %55 : vector<1x128xf32>
    %64 = arith.subf %60, %56 : vector<1x128xf32>
    %65 = arith.mulf %61, %61 : vector<1x128xf32>
    %66 = arith.mulf %62, %62 : vector<1x128xf32>
    %67 = arith.addf %65, %66 : vector<1x128xf32>
    %68 = math.sqrt %67 : vector<1x128xf32>
    %69 = arith.mulf %63, %63 : vector<1x128xf32>
    %70 = arith.mulf %64, %64 : vector<1x128xf32>
    %71 = arith.addf %69, %70 : vector<1x128xf32>
    %72 = math.sqrt %71 : vector<1x128xf32>
    %73 = arith.subf %68, %72 : vector<1x128xf32>
    %cst_27 = arith.constant 9.99999971E-10 : f32
    %74 = vector.broadcast %cst_27 : f32 to vector<1x128xf32>
    %75 = arith.maximumf %68, %74 : vector<1x128xf32>
    %76 = arith.divf %73, %75 : vector<1x128xf32>
    %cst_28 = arith.constant 0.000000e+00 : f32
    %77 = vector.broadcast %cst_28 : f32 to vector<1x128xf32>
    %78 = arith.cmpf olt, %76, %77 : vector<1x128xf32>
    %cst_29 = arith.constant -1.000000e+00 : f32
    %cst_30 = arith.constant 1.000000e+00 : f32
    %79 = vector.broadcast %cst_29 : f32 to vector<1x128xf32>
    %80 = vector.broadcast %cst_30 : f32 to vector<1x128xf32>
    %81 = arith.select %78, %79, %80 : vector<1x128xi1>, vector<1x128xf32>
    %82 = math.absf %76 : vector<1x128xf32>
    %cst_31 = arith.constant 2.41421366 : f32
    %83 = vector.broadcast %cst_31 : f32 to vector<1x128xf32>
    %84 = arith.cmpf ogt, %82, %83 : vector<1x128xf32>
    %cst_32 = arith.constant 0.414213568 : f32
    %85 = vector.broadcast %cst_32 : f32 to vector<1x128xf32>
    %86 = arith.cmpf ogt, %82, %85 : vector<1x128xf32>
    %cst_33 = arith.constant 1.000000e+00 : f32
    %87 = vector.broadcast %cst_33 : f32 to vector<1x128xf32>
    %88 = arith.maximumf %82, %87 : vector<1x128xf32>
    %cst_34 = arith.constant -1.000000e+00 : f32
    %89 = vector.broadcast %cst_34 : f32 to vector<1x128xf32>
    %90 = arith.divf %89, %88 : vector<1x128xf32>
    %cst_35 = arith.constant 1.000000e+00 : f32
    %91 = vector.broadcast %cst_35 : f32 to vector<1x128xf32>
    %92 = arith.subf %82, %91 : vector<1x128xf32>
    %cst_36 = arith.constant 1.000000e+00 : f32
    %93 = vector.broadcast %cst_36 : f32 to vector<1x128xf32>
    %94 = arith.addf %82, %93 : vector<1x128xf32>
    %95 = arith.divf %92, %94 : vector<1x128xf32>
    %96 = arith.select %86, %95, %82 : vector<1x128xi1>, vector<1x128xf32>
    %97 = arith.select %84, %90, %96 : vector<1x128xi1>, vector<1x128xf32>
    %cst_37 = arith.constant 0.785398185 : f32
    %cst_38 = arith.constant 0.000000e+00 : f32
    %98 = vector.broadcast %cst_37 : f32 to vector<1x128xf32>
    %99 = vector.broadcast %cst_38 : f32 to vector<1x128xf32>
    %100 = arith.select %86, %98, %99 : vector<1x128xi1>, vector<1x128xf32>
    %cst_39 = arith.constant 1.57079637 : f32
    %101 = vector.broadcast %cst_39 : f32 to vector<1x128xf32>
    %102 = arith.select %84, %101, %100 : vector<1x128xi1>, vector<1x128xf32>
    %103 = arith.mulf %97, %97 : vector<1x128xf32>
    %cst_40 = arith.constant 0.0805374458 : f32
    %104 = vector.broadcast %cst_40 : f32 to vector<1x128xf32>
    %105 = arith.mulf %104, %103 : vector<1x128xf32>
    %cst_41 = arith.constant 0.138776854 : f32
    %106 = vector.broadcast %cst_41 : f32 to vector<1x128xf32>
    %107 = arith.subf %105, %106 : vector<1x128xf32>
    %108 = arith.mulf %107, %103 : vector<1x128xf32>
    %cst_42 = arith.constant 0.199777111 : f32
    %109 = vector.broadcast %cst_42 : f32 to vector<1x128xf32>
    %110 = arith.addf %108, %109 : vector<1x128xf32>
    %111 = arith.mulf %110, %103 : vector<1x128xf32>
    %cst_43 = arith.constant 0.333329499 : f32
    %112 = vector.broadcast %cst_43 : f32 to vector<1x128xf32>
    %113 = arith.subf %111, %112 : vector<1x128xf32>
    %114 = arith.mulf %113, %103 : vector<1x128xf32>
    %115 = arith.mulf %114, %97 : vector<1x128xf32>
    %116 = arith.addf %115, %97 : vector<1x128xf32>
    %117 = arith.addf %102, %116 : vector<1x128xf32>
    %118 = arith.mulf %81, %117 : vector<1x128xf32>
    %cst_44 = arith.constant 0.405284733 : f32
    %119 = vector.broadcast %cst_44 : f32 to vector<1x128xf32>
    %120 = arith.mulf %119, %118 : vector<1x128xf32>
    %121 = arith.mulf %120, %118 : vector<1x128xf32>
    %122 = arith.mulf %63, %61 : vector<1x128xf32>
    %123 = arith.mulf %64, %62 : vector<1x128xf32>
    %124 = arith.addf %122, %123 : vector<1x128xf32>
    %125 = arith.mulf %68, %72 : vector<1x128xf32>
    %cst_45 = arith.constant 9.99999971E-10 : f32
    %126 = vector.broadcast %cst_45 : f32 to vector<1x128xf32>
    %127 = arith.maximumf %125, %126 : vector<1x128xf32>
    %128 = arith.divf %124, %127 : vector<1x128xf32>
    %129 = arith.subf %128, %121 : vector<1x128xf32>
    %cst_46 = arith.constant 1.000000e+00 : f32
    %130 = vector.broadcast %cst_46 : f32 to vector<1x128xf32>
    %131 = arith.subf %130, %129 : vector<1x128xf32>
    %132 = arith.mulf %14, %131 : vector<1x128xf32>
    %133 = vector.shape_cast %132 : vector<1x128xf32> to vector<1x1x128xf32>
    %cst_47 = arith.constant dense<0.000000e+00> : vector<1xf32>
    %134 = vector.multi_reduction <add>, %133, %cst_47 [1, 2] : vector<1x1x128xf32> to vector<1xf32>
    %135 = vector.shape_cast %134 : vector<1xf32> to vector<1x1x1xf32>
    %136 = vector.extract %135[0, 0, 0] : f32 from vector<1x1x1xf32>
    %137 = vector.broadcast %136 : f32 to vector<1x1xf32>
    %138 = vector.extract_strided_slice %48 {offsets = [0, 0], sizes = [1, 128], strides = [1, 1]} : vector<2x128xf32> to vector<1x128xf32>
    %139 = vector.extract_strided_slice %48 {offsets = [1, 0], sizes = [1, 128], strides = [1, 1]} : vector<2x128xf32> to vector<1x128xf32>
    %cst_48 = arith.constant 5.000000e-01 : f32
    %140 = vector.broadcast %cst_48 : f32 to vector<1x128xf32>
    %141 = arith.mulf %138, %140 : vector<1x128xf32>
    %142 = arith.subf %49, %141 : vector<1x128xf32>
    %cst_49 = arith.constant 5.000000e-01 : f32
    %143 = vector.broadcast %cst_49 : f32 to vector<1x128xf32>
    %144 = arith.mulf %138, %143 : vector<1x128xf32>
    %145 = arith.addf %49, %144 : vector<1x128xf32>
    %cst_50 = arith.constant 5.000000e-01 : f32
    %146 = vector.broadcast %cst_50 : f32 to vector<1x128xf32>
    %147 = arith.mulf %139, %146 : vector<1x128xf32>
    %148 = arith.subf %50, %147 : vector<1x128xf32>
    %cst_51 = arith.constant 5.000000e-01 : f32
    %149 = vector.broadcast %cst_51 : f32 to vector<1x128xf32>
    %150 = arith.mulf %139, %149 : vector<1x128xf32>
    %151 = arith.addf %50, %150 : vector<1x128xf32>
    %cst_52 = arith.constant 5.000000e-01 : f32
    %152 = vector.broadcast %cst_52 : f32 to vector<1x128xf32>
    %153 = arith.mulf %8, %152 : vector<1x128xf32>
    %154 = arith.subf %51, %153 : vector<1x128xf32>
    %cst_53 = arith.constant 5.000000e-01 : f32
    %155 = vector.broadcast %cst_53 : f32 to vector<1x128xf32>
    %156 = arith.mulf %8, %155 : vector<1x128xf32>
    %157 = arith.addf %51, %156 : vector<1x128xf32>
    %cst_54 = arith.constant 5.000000e-01 : f32
    %158 = vector.broadcast %cst_54 : f32 to vector<1x128xf32>
    %159 = arith.mulf %9, %158 : vector<1x128xf32>
    %160 = arith.subf %52, %159 : vector<1x128xf32>
    %cst_55 = arith.constant 5.000000e-01 : f32
    %161 = vector.broadcast %cst_55 : f32 to vector<1x128xf32>
    %162 = arith.mulf %9, %161 : vector<1x128xf32>
    %163 = arith.addf %52, %162 : vector<1x128xf32>
    %164 = arith.minimumf %145, %157 : vector<1x128xf32>
    %165 = arith.maximumf %142, %154 : vector<1x128xf32>
    %166 = arith.subf %164, %165 : vector<1x128xf32>
    %cst_56 = arith.constant 0.000000e+00 : f32
    %167 = vector.broadcast %cst_56 : f32 to vector<1x128xf32>
    %168 = arith.maximumf %166, %167 : vector<1x128xf32>
    %169 = arith.minimumf %151, %163 : vector<1x128xf32>
    %170 = arith.maximumf %148, %160 : vector<1x128xf32>
    %171 = arith.subf %169, %170 : vector<1x128xf32>
    %cst_57 = arith.constant 0.000000e+00 : f32
    %172 = vector.broadcast %cst_57 : f32 to vector<1x128xf32>
    %173 = arith.maximumf %171, %172 : vector<1x128xf32>
    %174 = arith.mulf %168, %173 : vector<1x128xf32>
    %175 = arith.subf %145, %142 : vector<1x128xf32>
    %176 = arith.subf %151, %148 : vector<1x128xf32>
    %cst_58 = arith.constant 9.99999971E-10 : f32
    %177 = vector.broadcast %cst_58 : f32 to vector<1x128xf32>
    %178 = arith.addf %176, %177 : vector<1x128xf32>
    %179 = arith.subf %157, %154 : vector<1x128xf32>
    %180 = arith.subf %163, %160 : vector<1x128xf32>
    %cst_59 = arith.constant 9.99999971E-10 : f32
    %181 = vector.broadcast %cst_59 : f32 to vector<1x128xf32>
    %182 = arith.addf %180, %181 : vector<1x128xf32>
    %183 = arith.mulf %175, %178 : vector<1x128xf32>
    %184 = arith.mulf %179, %182 : vector<1x128xf32>
    %185 = arith.addf %183, %184 : vector<1x128xf32>
    %186 = arith.subf %185, %174 : vector<1x128xf32>
    %cst_60 = arith.constant 9.99999971E-10 : f32
    %187 = vector.broadcast %cst_60 : f32 to vector<1x128xf32>
    %188 = arith.addf %186, %187 : vector<1x128xf32>
    %189 = arith.divf %174, %188 : vector<1x128xf32>
    %190 = arith.mulf %175, %178 : vector<1x128xf32>
    %cst_61 = arith.constant 2.500000e-01 : f32
    %191 = vector.broadcast %cst_61 : f32 to vector<1x128xf32>
    %192 = arith.mulf %191, %179 : vector<1x128xf32>
    %193 = arith.mulf %192, %182 : vector<1x128xf32>
    %194 = arith.cmpf olt, %190, %193 : vector<1x128xf32>
    %cst_62 = arith.constant 1.000000e+00 : f32
    %cst_63 = arith.constant 0.000000e+00 : f32
    %195 = vector.broadcast %cst_62 : f32 to vector<1x128xf32>
    %196 = vector.broadcast %cst_63 : f32 to vector<1x128xf32>
    %197 = arith.select %194, %195, %196 : vector<1x128xi1>, vector<1x128xf32>
    %cst_64 = arith.constant 2.500000e-01 : f32
    %198 = vector.broadcast %cst_64 : f32 to vector<1x128xf32>
    %199 = arith.mulf %198, %179 : vector<1x128xf32>
    %200 = arith.mulf %199, %182 : vector<1x128xf32>
    %201 = arith.mulf %200, %197 : vector<1x128xf32>
    %202 = arith.mulf %175, %178 : vector<1x128xf32>
    %cst_65 = arith.constant 1.000000e+00 : f32
    %203 = vector.broadcast %cst_65 : f32 to vector<1x128xf32>
    %204 = arith.subf %203, %197 : vector<1x128xf32>
    %205 = arith.mulf %202, %204 : vector<1x128xf32>
    %206 = arith.addf %201, %205 : vector<1x128xf32>
    %cst_66 = arith.constant 9.99999971E-10 : f32
    %207 = vector.broadcast %cst_66 : f32 to vector<1x128xf32>
    %208 = arith.addf %206, %207 : vector<1x128xf32>
    %209 = arith.divf %174, %208 : vector<1x128xf32>
    %210 = arith.maximumf %145, %157 : vector<1x128xf32>
    %211 = arith.minimumf %142, %154 : vector<1x128xf32>
    %212 = arith.subf %210, %211 : vector<1x128xf32>
    %213 = arith.maximumf %151, %163 : vector<1x128xf32>
    %214 = arith.minimumf %148, %160 : vector<1x128xf32>
    %215 = arith.subf %213, %214 : vector<1x128xf32>
    %216 = arith.mulf %212, %212 : vector<1x128xf32>
    %217 = arith.mulf %215, %215 : vector<1x128xf32>
    %218 = arith.addf %216, %217 : vector<1x128xf32>
    %cst_67 = arith.constant 9.99999971E-10 : f32
    %219 = vector.broadcast %cst_67 : f32 to vector<1x128xf32>
    %220 = arith.addf %218, %219 : vector<1x128xf32>
    %221 = arith.addf %154, %157 : vector<1x128xf32>
    %222 = arith.subf %221, %142 : vector<1x128xf32>
    %223 = arith.subf %222, %145 : vector<1x128xf32>
    %224 = arith.addf %160, %163 : vector<1x128xf32>
    %225 = arith.subf %224, %148 : vector<1x128xf32>
    %226 = arith.subf %225, %151 : vector<1x128xf32>
    %227 = arith.mulf %223, %223 : vector<1x128xf32>
    %228 = arith.mulf %226, %226 : vector<1x128xf32>
    %229 = arith.addf %227, %228 : vector<1x128xf32>
    %cst_68 = arith.constant 2.500000e-01 : f32
    %230 = vector.broadcast %cst_68 : f32 to vector<1x128xf32>
    %231 = arith.mulf %229, %230 : vector<1x128xf32>
    %232 = arith.divf %179, %182 : vector<1x128xf32>
    %cst_69 = arith.constant 0.000000e+00 : f32
    %233 = vector.broadcast %cst_69 : f32 to vector<1x128xf32>
    %234 = arith.cmpf olt, %232, %233 : vector<1x128xf32>
    %cst_70 = arith.constant -1.000000e+00 : f32
    %cst_71 = arith.constant 1.000000e+00 : f32
    %235 = vector.broadcast %cst_70 : f32 to vector<1x128xf32>
    %236 = vector.broadcast %cst_71 : f32 to vector<1x128xf32>
    %237 = arith.select %234, %235, %236 : vector<1x128xi1>, vector<1x128xf32>
    %238 = math.absf %232 : vector<1x128xf32>
    %cst_72 = arith.constant 2.41421366 : f32
    %239 = vector.broadcast %cst_72 : f32 to vector<1x128xf32>
    %240 = arith.cmpf ogt, %238, %239 : vector<1x128xf32>
    %cst_73 = arith.constant 0.414213568 : f32
    %241 = vector.broadcast %cst_73 : f32 to vector<1x128xf32>
    %242 = arith.cmpf ogt, %238, %241 : vector<1x128xf32>
    %cst_74 = arith.constant 1.000000e+00 : f32
    %243 = vector.broadcast %cst_74 : f32 to vector<1x128xf32>
    %244 = arith.maximumf %238, %243 : vector<1x128xf32>
    %cst_75 = arith.constant -1.000000e+00 : f32
    %245 = vector.broadcast %cst_75 : f32 to vector<1x128xf32>
    %246 = arith.divf %245, %244 : vector<1x128xf32>
    %cst_76 = arith.constant 1.000000e+00 : f32
    %247 = vector.broadcast %cst_76 : f32 to vector<1x128xf32>
    %248 = arith.subf %238, %247 : vector<1x128xf32>
    %cst_77 = arith.constant 1.000000e+00 : f32
    %249 = vector.broadcast %cst_77 : f32 to vector<1x128xf32>
    %250 = arith.addf %238, %249 : vector<1x128xf32>
    %251 = arith.divf %248, %250 : vector<1x128xf32>
    %252 = arith.select %242, %251, %238 : vector<1x128xi1>, vector<1x128xf32>
    %253 = arith.select %240, %246, %252 : vector<1x128xi1>, vector<1x128xf32>
    %cst_78 = arith.constant 0.785398185 : f32
    %cst_79 = arith.constant 0.000000e+00 : f32
    %254 = vector.broadcast %cst_78 : f32 to vector<1x128xf32>
    %255 = vector.broadcast %cst_79 : f32 to vector<1x128xf32>
    %256 = arith.select %242, %254, %255 : vector<1x128xi1>, vector<1x128xf32>
    %cst_80 = arith.constant 1.57079637 : f32
    %257 = vector.broadcast %cst_80 : f32 to vector<1x128xf32>
    %258 = arith.select %240, %257, %256 : vector<1x128xi1>, vector<1x128xf32>
    %259 = arith.mulf %253, %253 : vector<1x128xf32>
    %cst_81 = arith.constant 0.0805374458 : f32
    %260 = vector.broadcast %cst_81 : f32 to vector<1x128xf32>
    %261 = arith.mulf %260, %259 : vector<1x128xf32>
    %cst_82 = arith.constant 0.138776854 : f32
    %262 = vector.broadcast %cst_82 : f32 to vector<1x128xf32>
    %263 = arith.subf %261, %262 : vector<1x128xf32>
    %264 = arith.mulf %263, %259 : vector<1x128xf32>
    %cst_83 = arith.constant 0.199777111 : f32
    %265 = vector.broadcast %cst_83 : f32 to vector<1x128xf32>
    %266 = arith.addf %264, %265 : vector<1x128xf32>
    %267 = arith.mulf %266, %259 : vector<1x128xf32>
    %cst_84 = arith.constant 0.333329499 : f32
    %268 = vector.broadcast %cst_84 : f32 to vector<1x128xf32>
    %269 = arith.subf %267, %268 : vector<1x128xf32>
    %270 = arith.mulf %269, %259 : vector<1x128xf32>
    %271 = arith.mulf %270, %253 : vector<1x128xf32>
    %272 = arith.addf %271, %253 : vector<1x128xf32>
    %273 = arith.addf %258, %272 : vector<1x128xf32>
    %274 = arith.mulf %237, %273 : vector<1x128xf32>
    %275 = arith.divf %175, %178 : vector<1x128xf32>
    %cst_85 = arith.constant 0.000000e+00 : f32
    %276 = vector.broadcast %cst_85 : f32 to vector<1x128xf32>
    %277 = arith.cmpf olt, %275, %276 : vector<1x128xf32>
    %cst_86 = arith.constant -1.000000e+00 : f32
    %cst_87 = arith.constant 1.000000e+00 : f32
    %278 = vector.broadcast %cst_86 : f32 to vector<1x128xf32>
    %279 = vector.broadcast %cst_87 : f32 to vector<1x128xf32>
    %280 = arith.select %277, %278, %279 : vector<1x128xi1>, vector<1x128xf32>
    %281 = math.absf %275 : vector<1x128xf32>
    %cst_88 = arith.constant 2.41421366 : f32
    %282 = vector.broadcast %cst_88 : f32 to vector<1x128xf32>
    %283 = arith.cmpf ogt, %281, %282 : vector<1x128xf32>
    %cst_89 = arith.constant 0.414213568 : f32
    %284 = vector.broadcast %cst_89 : f32 to vector<1x128xf32>
    %285 = arith.cmpf ogt, %281, %284 : vector<1x128xf32>
    %cst_90 = arith.constant 1.000000e+00 : f32
    %286 = vector.broadcast %cst_90 : f32 to vector<1x128xf32>
    %287 = arith.maximumf %281, %286 : vector<1x128xf32>
    %cst_91 = arith.constant -1.000000e+00 : f32
    %288 = vector.broadcast %cst_91 : f32 to vector<1x128xf32>
    %289 = arith.divf %288, %287 : vector<1x128xf32>
    %cst_92 = arith.constant 1.000000e+00 : f32
    %290 = vector.broadcast %cst_92 : f32 to vector<1x128xf32>
    %291 = arith.subf %281, %290 : vector<1x128xf32>
    %cst_93 = arith.constant 1.000000e+00 : f32
    %292 = vector.broadcast %cst_93 : f32 to vector<1x128xf32>
    %293 = arith.addf %281, %292 : vector<1x128xf32>
    %294 = arith.divf %291, %293 : vector<1x128xf32>
    %295 = arith.select %285, %294, %281 : vector<1x128xi1>, vector<1x128xf32>
    %296 = arith.select %283, %289, %295 : vector<1x128xi1>, vector<1x128xf32>
    %cst_94 = arith.constant 0.785398185 : f32
    %cst_95 = arith.constant 0.000000e+00 : f32
    %297 = vector.broadcast %cst_94 : f32 to vector<1x128xf32>
    %298 = vector.broadcast %cst_95 : f32 to vector<1x128xf32>
    %299 = arith.select %285, %297, %298 : vector<1x128xi1>, vector<1x128xf32>
    %cst_96 = arith.constant 1.57079637 : f32
    %300 = vector.broadcast %cst_96 : f32 to vector<1x128xf32>
    %301 = arith.select %283, %300, %299 : vector<1x128xi1>, vector<1x128xf32>
    %302 = arith.mulf %296, %296 : vector<1x128xf32>
    %cst_97 = arith.constant 0.0805374458 : f32
    %303 = vector.broadcast %cst_97 : f32 to vector<1x128xf32>
    %304 = arith.mulf %303, %302 : vector<1x128xf32>
    %cst_98 = arith.constant 0.138776854 : f32
    %305 = vector.broadcast %cst_98 : f32 to vector<1x128xf32>
    %306 = arith.subf %304, %305 : vector<1x128xf32>
    %307 = arith.mulf %306, %302 : vector<1x128xf32>
    %cst_99 = arith.constant 0.199777111 : f32
    %308 = vector.broadcast %cst_99 : f32 to vector<1x128xf32>
    %309 = arith.addf %307, %308 : vector<1x128xf32>
    %310 = arith.mulf %309, %302 : vector<1x128xf32>
    %cst_100 = arith.constant 0.333329499 : f32
    %311 = vector.broadcast %cst_100 : f32 to vector<1x128xf32>
    %312 = arith.subf %310, %311 : vector<1x128xf32>
    %313 = arith.mulf %312, %302 : vector<1x128xf32>
    %314 = arith.mulf %313, %296 : vector<1x128xf32>
    %315 = arith.addf %314, %296 : vector<1x128xf32>
    %316 = arith.addf %301, %315 : vector<1x128xf32>
    %317 = arith.mulf %280, %316 : vector<1x128xf32>
    %318 = arith.subf %274, %317 : vector<1x128xf32>
    %cst_101 = arith.constant 0.405284733 : f32
    %319 = vector.broadcast %cst_101 : f32 to vector<1x128xf32>
    %320 = arith.mulf %319, %318 : vector<1x128xf32>
    %321 = arith.mulf %320, %318 : vector<1x128xf32>
    %cst_102 = arith.constant 1.000000e+00 : f32
    %322 = vector.broadcast %cst_102 : f32 to vector<1x128xf32>
    %323 = arith.subf %322, %189 : vector<1x128xf32>
    %324 = arith.addf %323, %321 : vector<1x128xf32>
    %325 = arith.divf %321, %324 : vector<1x128xf32>
    %326 = arith.divf %231, %220 : vector<1x128xf32>
    %327 = arith.mulf %321, %325 : vector<1x128xf32>
    %328 = arith.addf %326, %327 : vector<1x128xf32>
    %329 = arith.subf %209, %328 : vector<1x128xf32>
    %cst_103 = arith.constant 1.000000e+00 : f32
    %330 = vector.broadcast %cst_103 : f32 to vector<1x128xf32>
    %331 = arith.subf %330, %329 : vector<1x128xf32>
    %332 = arith.mulf %15, %331 : vector<1x128xf32>
    %333 = vector.shape_cast %332 : vector<1x128xf32> to vector<1x1x128xf32>
    %cst_104 = arith.constant dense<0.000000e+00> : vector<1xf32>
    %334 = vector.multi_reduction <add>, %333, %cst_104 [1, 2] : vector<1x1x128xf32> to vector<1xf32>
    %335 = vector.shape_cast %334 : vector<1xf32> to vector<1x1x1xf32>
    %336 = vector.extract %335[0, 0, 0] : f32 from vector<1x1x1xf32>
    %337 = vector.broadcast %336 : f32 to vector<1x1xf32>
    %cst_105 = arith.constant 1.000000e+00 : f32
    %338 = vector.broadcast %cst_105 : f32 to vector<20x128xf32>
    %339 = arith.subf %338, %18 : vector<20x128xf32>
    %340 = arith.mulf %339, %6 : vector<20x128xf32>
    %cst_106 = arith.constant 4.000000e+00 : f32
    %341 = vector.broadcast %cst_106 : f32 to vector<20x128xf32>
    %342 = arith.mulf %341, %18 : vector<20x128xf32>
    %cst_107 = arith.constant 1.000000e+00 : f32
    %343 = vector.broadcast %cst_107 : f32 to vector<20x128xf32>
    %344 = arith.addf %343, %342 : vector<20x128xf32>
    %cst_108 = arith.constant 0.000000e+00 : f32
    %345 = vector.broadcast %cst_108 : f32 to vector<20x128xf32>
    %346 = arith.subf %345, %6 : vector<20x128xf32>
    %cst_109 = arith.constant 0.000000e+00 : f32
    %347 = vector.broadcast %cst_109 : f32 to vector<20x128xf32>
    %348 = arith.maximumf %346, %347 : vector<20x128xf32>
    %349 = math.absf %6 : vector<20x128xf32>
    %cst_110 = arith.constant 0.000000e+00 : f32
    %350 = vector.broadcast %cst_110 : f32 to vector<20x128xf32>
    %351 = arith.subf %350, %349 : vector<20x128xf32>
    %352 = math.exp %351 : vector<20x128xf32>
    %cst_111 = arith.constant 1.000000e+00 : f32
    %353 = vector.broadcast %cst_111 : f32 to vector<20x128xf32>
    %354 = arith.addf %353, %352 : vector<20x128xf32>
    %355 = math.log %354 : vector<20x128xf32>
    %356 = arith.addf %348, %355 : vector<20x128xf32>
    %357 = arith.mulf %344, %356 : vector<20x128xf32>
    %358 = arith.addf %340, %357 : vector<20x128xf32>
    %359 = vector.broadcast %16 : vector<1x128xf32> to vector<20x128xf32>
    %360 = arith.mulf %359, %358 : vector<20x128xf32>
    %361 = vector.shape_cast %360 : vector<20x128xf32> to vector<1x20x128xf32>
    %cst_112 = arith.constant dense<0.000000e+00> : vector<1xf32>
    %362 = vector.multi_reduction <add>, %361, %cst_112 [1, 2] : vector<1x20x128xf32> to vector<1xf32>
    %363 = vector.shape_cast %362 : vector<1xf32> to vector<1x1x1xf32>
    %364 = vector.extract %363[0, 0, 0] : f32 from vector<1x1x1xf32>
    %365 = vector.broadcast %364 : f32 to vector<1x1xf32>
    %cst_113 = arith.constant 0.000000e+00 : f32
    %366 = vector.broadcast %cst_113 : f32 to vector<1x128xf32>
    %367 = arith.maximumf %329, %366 : vector<1x128xf32>
    %368 = arith.mulf %17, %367 : vector<1x128xf32>
    %cst_114 = arith.constant 0.000000e+00 : f32
    %369 = vector.broadcast %cst_114 : f32 to vector<1x128xf32>
    %370 = arith.subf %369, %5 : vector<1x128xf32>
    %cst_115 = arith.constant 0.000000e+00 : f32
    %371 = vector.broadcast %cst_115 : f32 to vector<1x128xf32>
    %372 = arith.maximumf %370, %371 : vector<1x128xf32>
    %373 = math.absf %5 : vector<1x128xf32>
    %cst_116 = arith.constant 0.000000e+00 : f32
    %374 = vector.broadcast %cst_116 : f32 to vector<1x128xf32>
    %375 = arith.subf %374, %373 : vector<1x128xf32>
    %376 = math.exp %375 : vector<1x128xf32>
    %cst_117 = arith.constant 1.000000e+00 : f32
    %377 = vector.broadcast %cst_117 : f32 to vector<1x128xf32>
    %378 = arith.addf %377, %376 : vector<1x128xf32>
    %379 = math.log %378 : vector<1x128xf32>
    %380 = arith.addf %372, %379 : vector<1x128xf32>
    %cst_118 = arith.constant 9.000000e+00 : f32
    %381 = vector.broadcast %cst_118 : f32 to vector<1x128xf32>
    %382 = arith.mulf %381, %380 : vector<1x128xf32>
    %383 = arith.subf %382, %5 : vector<1x128xf32>
    %384 = arith.mulf %368, %383 : vector<1x128xf32>
    %385 = vector.shape_cast %384 : vector<1x128xf32> to vector<1x1x128xf32>
    %cst_119 = arith.constant dense<0.000000e+00> : vector<1xf32>
    %386 = vector.multi_reduction <add>, %385, %cst_119 [1, 2] : vector<1x1x128xf32> to vector<1xf32>
    %387 = vector.shape_cast %386 : vector<1xf32> to vector<1x1x1xf32>
    %388 = vector.extract %387[0, 0, 0] : f32 from vector<1x1x1xf32>
    %389 = vector.broadcast %388 : f32 to vector<1x1xf32>
    %390 = tpu.iota {dimensions = array<i32: 1>} : vector<1x8xi32>
    %c0_i32_120 = arith.constant 0 : i32
    %391 = vector.broadcast %c0_i32_120 : i32 to vector<1x8xi32>
    %392 = arith.cmpi eq, %390, %391 : vector<1x8xi32>
    %cst_121 = arith.constant 0.000000e+00 : f32
    %393 = vector.shape_cast %41 : vector<1x1xf32> to vector<1x1xf32>
    %394 = vector.broadcast %393 : vector<1x1xf32> to vector<1x8xf32>
    %395 = vector.broadcast %cst_121 : f32 to vector<1x8xf32>
    %396 = arith.select %392, %394, %395 : vector<1x8xi1>, vector<1x8xf32>
    %c1_i32 = arith.constant 1 : i32
    %397 = vector.broadcast %c1_i32 : i32 to vector<1x8xi32>
    %398 = arith.cmpi eq, %390, %397 : vector<1x8xi32>
    %cst_122 = arith.constant 0.000000e+00 : f32
    %399 = vector.shape_cast %137 : vector<1x1xf32> to vector<1x1xf32>
    %400 = vector.broadcast %399 : vector<1x1xf32> to vector<1x8xf32>
    %401 = vector.broadcast %cst_122 : f32 to vector<1x8xf32>
    %402 = arith.select %398, %400, %401 : vector<1x8xi1>, vector<1x8xf32>
    %403 = arith.addf %396, %402 : vector<1x8xf32>
    %c2_i32 = arith.constant 2 : i32
    %404 = vector.broadcast %c2_i32 : i32 to vector<1x8xi32>
    %405 = arith.cmpi eq, %390, %404 : vector<1x8xi32>
    %cst_123 = arith.constant 0.000000e+00 : f32
    %406 = vector.shape_cast %337 : vector<1x1xf32> to vector<1x1xf32>
    %407 = vector.broadcast %406 : vector<1x1xf32> to vector<1x8xf32>
    %408 = vector.broadcast %cst_123 : f32 to vector<1x8xf32>
    %409 = arith.select %405, %407, %408 : vector<1x8xi1>, vector<1x8xf32>
    %410 = arith.addf %403, %409 : vector<1x8xf32>
    %c3_i32 = arith.constant 3 : i32
    %411 = vector.broadcast %c3_i32 : i32 to vector<1x8xi32>
    %412 = arith.cmpi eq, %390, %411 : vector<1x8xi32>
    %cst_124 = arith.constant 0.000000e+00 : f32
    %413 = vector.shape_cast %365 : vector<1x1xf32> to vector<1x1xf32>
    %414 = vector.broadcast %413 : vector<1x1xf32> to vector<1x8xf32>
    %415 = vector.broadcast %cst_124 : f32 to vector<1x8xf32>
    %416 = arith.select %412, %414, %415 : vector<1x8xi1>, vector<1x8xf32>
    %417 = arith.addf %410, %416 : vector<1x8xf32>
    %c4_i32 = arith.constant 4 : i32
    %418 = vector.broadcast %c4_i32 : i32 to vector<1x8xi32>
    %419 = arith.cmpi eq, %390, %418 : vector<1x8xi32>
    %cst_125 = arith.constant 0.000000e+00 : f32
    %420 = vector.shape_cast %389 : vector<1x1xf32> to vector<1x1xf32>
    %421 = vector.broadcast %420 : vector<1x1xf32> to vector<1x8xf32>
    %422 = vector.broadcast %cst_125 : f32 to vector<1x8xf32>
    %423 = arith.select %419, %421, %422 : vector<1x8xi1>, vector<1x8xf32>
    %424 = arith.addf %417, %423 : vector<1x8xf32>
    %c0_126 = arith.constant 0 : index
    %c0_127 = arith.constant 0 : index
    %425 = vector.load %arg4[%c0_126, %c0_127] : memref<1x8xf32, #tpu.memory_space<vmem>>, vector<1x8xf32>
    %426 = arith.addf %425, %424 : vector<1x8xf32>
    %c0_128 = arith.constant 0 : index
    %c0_129 = arith.constant 0 : index
    %427 = vector.load %arg4[%c0_128, %c0_129] : memref<1x8xf32, #tpu.memory_space<vmem>>, vector<1x8xf32>
    tpu.vector_store %arg4[%c0_128, %c0_129], %426 {strides = array<i32>} : memref<1x8xf32, #tpu.memory_space<vmem>>, vector<1x8xf32>,
    return
  }
  func.func @transform_0(%arg0: i32) -> (i32, i32) {
    %c0_i32 = arith.constant 0 : i32
    %c0_i32_0 = arith.constant 0 : i32
    return %c0_i32, %arg0 : i32, i32
  }
  func.func @transform_1(%arg0: i32) -> (i32, i32) {
    %c0_i32 = arith.constant 0 : i32
    %c0_i32_0 = arith.constant 0 : i32
    return %c0_i32, %arg0 : i32, i32
  }
  func.func @transform_2(%arg0: i32) -> (i32, i32) {
    %c0_i32 = arith.constant 0 : i32
    %c0_i32_0 = arith.constant 0 : i32
    return %c0_i32, %arg0 : i32, i32
  }
  func.func @transform_3(%arg0: i32) -> (i32, i32) {
    %c0_i32 = arith.constant 0 : i32
    %c0_i32_0 = arith.constant 0 : i32
    %c0_i32_1 = arith.constant 0 : i32
    return %c0_i32, %c0_i32_0 : i32, i32
  }
}

</mosaic_0001>

<llo_original>
// kernel: tpu_custom_call.1
$region0: #{tpu_custom_call.1}
  #allocation0 [shape = 'u32[]', space=smem, size = 0x4, offset = 0x4, fixed_abs, tag = 'smem constant byte address 0x4 - core index']
  #allocation1 [shape = 'u32[144,128]{1,0:T(1,128)}', space=vmem, size = 0x12000, scoped, tag = 'internal scratch']
  %s0 = inlined_call_operand.hbm [shape: f32[25,128], index: 0, kind: input, shape index: {}]
  %s1 = inlined_call_operand.hbm [shape: f32[16,128], index: 1, kind: input, shape index: {}]
  %s2 = inlined_call_operand.hbm [shape: f32[20,128], index: 2, kind: input, shape index: {}]
  %s3 = inlined_call_operand.hbm [shape: f32[1,8], index: 3, kind: output, shape index: {}]
  %s4 = sld [smem:[#allocation0]]
  $region38: #{tpu_custom_call.1} parent=0
    _
  %s6 = ssub.s32 1, %s4
  %s7 = scalar_select 0, %s6, %s4
  $region1: #{tpu_custom_call.1} parent=0
    #allocation2 [shape = 'u8[16384]{0}', space=vmem, size = 0x4000, scoped, tag = 'input window, operand 0, single buffered']
    #allocation3 [shape = 's32[1]{0}', space=sflag, size = 0x4, scoped, tag = 'scoped memory for tpu_custom_call.1']
    #allocation4 [shape = 's32[1]{0}', space=sflag, size = 0x4, scoped, tag = 'scoped memory for tpu_custom_call.1']
    #allocation5 [shape = 'u8[8192]{0}', space=vmem, size = 0x2000, scoped, tag = 'input window, operand 1, single buffered']
    #allocation6 [shape = 's32[1]{0}', space=sflag, size = 0x4, scoped, tag = 'scoped memory for tpu_custom_call.1']
    #allocation7 [shape = 'u8[12288]{0}', space=vmem, size = 0x3000, scoped, tag = 'input window, operand 2, single buffered']
    #allocation8 [shape = 'u8[512]{0}', space=vmem, size = 0x400, scoped, tag = 'output window, operand 0, single buffered']
    %8 = vsyncpa [#allocation3], 0
    %9 = vsyncpa [#allocation6], 0
    %10 = vsyncpa [#allocation4], 0
    // Predicated region
    $region2: #{tpu_custom_call.1} parent=1 // pred_check
      _
    $region3: #{tpu_custom_call.1} parent=1 // pred_check_branch
      %12 = sbr.rel (0) target = $region5
    $region4: #{tpu_custom_call.1} parent=1 // pred_region
      %s14 = ssub.s32 512, 512
      %15 = vsyncadd [#allocation3], %s14
      %s16 = sshll.u32 [#allocation2], 4
      %s17 = int_to_ptr.vmem [resolvable:$true] %s16
      %22 = dma.hbm_to_vmem [thread:$0]  %s0, 512, %s17, [#allocation3], 128, 128, 8
    $region5: #{tpu_custom_call.1} parent=1 // pred_fallthru
      _
    // Predicated region
    $region6: #{tpu_custom_call.1} parent=1 // pred_check
      _
    $region7: #{tpu_custom_call.1} parent=1 // pred_check_branch
      %24 = sbr.rel (0) target = $region9
    $region8: #{tpu_custom_call.1} parent=1 // pred_region
      %s26 = ssub.s32 256, 256
      %27 = vsyncadd [#allocation6], %s26
      %s28 = sshll.u32 [#allocation5], 4
      %s29 = int_to_ptr.vmem [resolvable:$true] %s28
      %34 = dma.hbm_to_vmem [thread:$0]  %s1, 256, %s29, [#allocation6], 128, 128, 8
    $region9: #{tpu_custom_call.1} parent=1 // pred_fallthru
      _
    // Predicated region
    $region10: #{tpu_custom_call.1} parent=1 // pred_check
      _
    $region11: #{tpu_custom_call.1} parent=1 // pred_check_branch
      %36 = sbr.rel (0) target = $region13
    $region12: #{tpu_custom_call.1} parent=1 // pred_region
      %s38 = ssub.s32 384, 384
      %39 = vsyncadd [#allocation6], %s38
      %s40 = sshll.u32 [#allocation7], 4
      %s41 = int_to_ptr.vmem [resolvable:$true] %s40
      %46 = dma.hbm_to_vmem [thread:$0]  %s2, 384, %s41, [#allocation6], 128, 128, 8
    $region13: #{tpu_custom_call.1} parent=1 // pred_fallthru
      _
    // Predicated region
    $region14: #{tpu_custom_call.1} parent=1 // pred_check
      _
    $region15: #{tpu_custom_call.1} parent=1 // pred_check_branch
      %48 = sbr.rel (0) target = $region17
    $region16: #{tpu_custom_call.1} parent=1 // pred_region
      %49 = dma.done [#allocation3], 512
    $region17: #{tpu_custom_call.1} parent=1 // pred_fallthru
      _
    // Predicated region
    $region18: #{tpu_custom_call.1} parent=1 // pred_check
      _
    $region19: #{tpu_custom_call.1} parent=1 // pred_check_branch
      %51 = sbr.rel (0) target = $region21
    $region20: #{tpu_custom_call.1} parent=1 // pred_region
      %52 = dma.done [#allocation6], 256
    $region21: #{tpu_custom_call.1} parent=1 // pred_fallthru
      _
    // Predicated region
    $region22: #{tpu_custom_call.1} parent=1 // pred_check
      _
    $region23: #{tpu_custom_call.1} parent=1 // pred_check_branch
      %54 = sbr.rel (0) target = $region25
    $region24: #{tpu_custom_call.1} parent=1 // pred_region
      %55 = dma.done [#allocation6], 384
    $region25: #{tpu_custom_call.1} parent=1 // pred_fallthru
      _
    %p56 = scmp.eq.s32.totalorder 0, 0
    // Predicated region
    $region26: #{tpu_custom_call.1} parent=1 // pred_check
      %p57 = pneg %p56
    $region27: #{tpu_custom_call.1} parent=1 // pred_check_branch
      %59 = sbr.rel (%p57) target = $region29
    $region28: #{tpu_custom_call.1} parent=1 // pred_region
      %vm60 = vcmask 57344
      %61 = vst.msk [vmem:[#allocation8] sm:$0x1] %vm60, 0.0
    $region29: #{tpu_custom_call.1} parent=1 // pred_fallthru
      _
    %v62 = vld [vmem:[#allocation2] sm:$0x3]
    %v63 = vld [vmem:[#allocation2 + $0x2] sm:$0x3]
    %v64 = vld [vmem:[#allocation2 + $0x4] sm:$0x1]
    %v65 = vld [vmem:[#allocation2 + $0x5] sm:$0xff]
    %v66 = vld [vmem:[#allocation2 + $0xd] sm:$0xff]
    %v67 = vld [vmem:[#allocation2 + $0x15] sm:$0xf]
    %v68 = vld [vmem:[#allocation5] sm:$0x3]
    %v69 = vld [vmem:[#allocation5 + $0x2] sm:$0x1]
    %v70 = vld [vmem:[#allocation5 + $0x3] sm:$0x1]
    %v71 = vld [vmem:[#allocation5 + $0x4] sm:$0x3]
    %v72 = vld [vmem:[#allocation5 + $0x6] sm:$0x3]
    %v73 = vld [vmem:[#allocation5 + $0x8] sm:$0x3]
    %v74 = vld [vmem:[#allocation5 + $0xa] sm:$0x1]
    %v75 = vld [vmem:[#allocation5 + $0xb] sm:$0x1]
    %v76 = vld [vmem:[#allocation5 + $0xc] sm:$0x1]
    %v77 = vld [vmem:[#allocation5 + $0xd] sm:$0x1]
    %v78 = vld [vmem:[#allocation5 + $0xe] sm:$0x1]
    %v79 = vld [vmem:[#allocation7] sm:$0xff]
    %v80 = vld [vmem:[#allocation7 + $0x8] sm:$0xff]
    %v81 = vld [vmem:[#allocation7 + $0x10] sm:$0xf]
    %v82 = vsub.f32 0.0, %v62
    %v83 = vmax.f32 %v82, 0.0
    %v84 = vand.u32 2147483647, %v62
    %v85 = vsub.f32 0.0, %v84
    %v86 = vmul.f32 %v85, 1.442695
    %v87 = vpow.pop %v86
    %v88 = vadd.f32 %v87, 1.0
    %v89 = vlog2.pop %v88
    %v90 = vmul.f32 %v89, 0.6931472
    %v91 = vadd.f32 %v83, %v90
    %v92 = vsub.f32 1.0, %v68
    %v93 = vmul.f32 %v92, %v62
    %v94 = vadd.f32 %v91, %v93
    %v95 = vlaneseq
    %v96 = vshrl.u32 %v95, 7
    %v97 = vsub.s32 0, %v96
    %v98 = vrot.slane %v74, %v97
    %v99 = vmul.f32 %v98, %v94
    %vm100 = vcmask 1041408
    %v101 = vsel %vm100, %v99, 0.0
    %102 = vadd.xlane.f32.xlu0 %v101
    %v103 = vpop.xlane.xlu0 %102
    %v104 = vrot.slane %v103, 4
    %v105 = vadd.f32 %v103, %v104
    %v106 = vrot.slane %v105, 2
    %v107 = vadd.f32 %v105, %v106
    %v108 = vrot.slane %v107, 1
    %v109 = vadd.f32 %v107, %v108
    %s110 = vtos %v109
    %v111 = vxor.u32 %v62, 2147483648
    %v112 = vmul.f32 %v111, 1.442695
    %v113 = vpow.pop %v112
    %v114 = vadd.f32 %v113, 1.0
    %v115 = vrcp.pop %v114
    %v116 = vmul.f32 1.0, %v115
    %v117 = vmul.f32 %v63, 1.442695
    %v118 = vpow.pop %v117
    %v119 = vmul.f32 %v118, %v71
    %v120 = vadd.f32 %v68, %v72
    %v121 = vadd.f32 %v116, %v72
    %v122 = vsub.f32 %v120, %v73
    %v123 = vsub.f32 %v121, %v73
    %v124 = vmul.f32 %v122, %v122
    %v126 = vrot.slane %v124, 1
    %v128 = vadd.f32 %v124, %v126
    %v129 = vrsqrt.pop %v128
    %v130 = vmul.f32 %v128, %v129
    %vm131 = vcmp.eq.f32.partialorder %v128, inf
    %v132 = vsel %vm131, %v128, %v130
    %vm133 = vcmp.eq.f32.partialorder %v128, 0.0
    %v134 = vand.u32 %v128, 2147483648
    %v135 = vsel %vm133, %v134, %v132
    %v136 = vmul.f32 %v123, %v123
    %v138 = vrot.slane %v136, 1
    %v140 = vadd.f32 %v136, %v138
    %v141 = vrsqrt.pop %v140
    %v142 = vmul.f32 %v140, %v141
    %vm143 = vcmp.eq.f32.partialorder %v140, inf
    %v144 = vsel %vm143, %v140, %v142
    %vm145 = vcmp.eq.f32.partialorder %v140, 0.0
    %v146 = vand.u32 %v140, 2147483648
    %v147 = vsel %vm145, %v146, %v144
    %v148 = vsub.f32 %v135, %v147
    %v149 = vmax.f32 %v135, 1e-09
    %v150 = vrcp.pop %v149
    %v151 = vmul.f32 %v148, %v150
    %vm152 = vcmp.lt.f32.partialorder %v151, 0.0
    %v153 = vsel %vm152, -1.0, 1.0
    %v154 = vand.u32 2147483647, %v151
    %vm155 = vcmp.gt.f32.partialorder %v154, 2.4142137
    %vm156 = vcmp.gt.f32.partialorder %v154, 0.41421357
    %v157 = vmax.f32 %v154, 1.0
    %v158 = vrcp.pop %v157
    %v159 = vmul.f32 -1.0, %v158
    %v160 = vsub.f32 %v154, 1.0
    %v161 = vadd.f32 %v154, 1.0
    %v162 = vrcp.pop %v161
    %v163 = vmul.f32 %v160, %v162
    %v164 = vsel %vm156, %v163, %v154
    %v165 = vsel %vm155, %v159, %v164
    %v166 = vsel %vm156, 0.7853982, 0.0
    %v167 = vsel %vm155, 1.5707964, %v166
    %v168 = vmul.f32 %v165, %v165
    %v169 = vmul.f32 %v168, 0.080537446
    %v170 = vsub.f32 %v169, 0.13877685
    %v171 = vmul.f32 %v170, %v168
    %v172 = vadd.f32 %v171, 0.19977711
    %v173 = vmul.f32 %v172, %v168
    %v174 = vsub.f32 %v173, 0.3333295
    %v175 = vmul.f32 %v174, %v168
    %v176 = vmul.f32 %v175, %v165
    %v177 = vadd.f32 %v176, %v165
    %v178 = vadd.f32 %v167, %v177
    %v179 = vmul.f32 %v153, %v178
    %v180 = vmul.f32 %v179, 0.40528473
    %v181 = vmul.f32 %v180, %v179
    %v182 = vmul.f32 %v123, %v122
    %v184 = vrot.slane %v182, 1
    %v186 = vadd.f32 %v182, %v184
    %v187 = vmul.f32 %v135, %v147
    %v188 = vmax.f32 %v187, 1e-09
    %v189 = vrcp.pop %v188
    %v190 = vmul.f32 %v186, %v189
    %v191 = vsub.f32 %v190, %v181
    %v192 = vsub.f32 1.0, %v191
    %v193 = vmul.f32 %v75, %v192
    %vm194 = vcmask 1040384
    %v195 = vsel %vm194, %v193, 0.0
    %196 = vadd.xlane.f32.xlu0 %v195
    %v197 = vpop.xlane.xlu0 %196
    %v198 = vrot.slane %v197, 4
    %v199 = vadd.f32 %v197, %v198
    %v200 = vrot.slane %v199, 2
    %v201 = vadd.f32 %v199, %v200
    %v202 = vrot.slane %v201, 1
    %v203 = vadd.f32 %v201, %v202
    %s204 = vtos %v203
    %v205 = vmul.f32 %v119, 0.5
    %v206 = vsub.f32 %v116, %v205
    %v207 = vadd.f32 %v116, %v205
    %v208 = vmul.f32 %v69, 0.5
    %v209 = vsub.f32 %v68, %v208
    %v210 = vadd.f32 %v68, %v208
    %v211 = vmul.f32 %v70, 0.5
    %v213 = vrot.slane %v211, 7
    %v215 = vsub.f32 %v68, %v213
    %v216 = vadd.f32 %v68, %v213
    %v217 = vmin.f32 %v207, %v210
    %v218 = vmax.f32 %v206, %v209
    %v219 = vsub.f32 %v217, %v218
    %v220 = vmax.f32 %v219, 0.0
    %v221 = vmin.f32 %v207, %v216
    %v222 = vmax.f32 %v206, %v215
    %v223 = vsub.f32 %v221, %v222
    %v224 = vmax.f32 %v223, 0.0
    %v226 = vrot.slane %v224, 1
    %v228 = vmul.f32 %v220, %v226
    %v229 = vsub.f32 %v207, %v206
    %v230 = vadd.f32 %v229, 1e-09
    %v231 = vsub.f32 %v210, %v209
    %v232 = vsub.f32 %v216, %v215
    %v233 = vadd.f32 %v232, 1e-09
    %v235 = vrot.slane %v230, 1
    %v237 = vmul.f32 %v229, %v235
    %v239 = vrot.slane %v233, 1
    %v241 = vmul.f32 %v231, %v239
    %v242 = vadd.f32 %v237, %v241
    %v243 = vsub.f32 %v242, %v228
    %v244 = vadd.f32 %v243, 1e-09
    %v245 = vrcp.pop %v244
    %v246 = vmul.f32 %v228, %v245
    %v247 = vmul.f32 %v231, 0.25
    %v248 = vmul.f32 %v247, %v239
    %vm249 = vcmp.lt.f32.partialorder %v237, %v248
    %v250 = vsel %vm249, 1.0, 0.0
    %v251 = vmul.f32 %v248, %v250
    %v252 = vsub.f32 1.0, %v250
    %v253 = vmul.f32 %v237, %v252
    %v254 = vadd.f32 %v251, %v253
    %v255 = vadd.f32 %v254, 1e-09
    %v256 = vrcp.pop %v255
    %v257 = vmul.f32 %v228, %v256
    %v258 = vmax.f32 %v207, %v210
    %v259 = vmin.f32 %v206, %v209
    %v260 = vsub.f32 %v258, %v259
    %v261 = vmax.f32 %v207, %v216
    %v262 = vmin.f32 %v206, %v215
    %v263 = vsub.f32 %v261, %v262
    %v264 = vmul.f32 %v260, %v260
    %v265 = vmul.f32 %v263, %v263
    %v267 = vrot.slane %v265, 1
    %v269 = vadd.f32 %v264, %v267
    %v270 = vadd.f32 %v269, 1e-09
    %v271 = vadd.f32 %v209, %v210
    %v272 = vsub.f32 %v271, %v206
    %v273 = vsub.f32 %v272, %v207
    %v274 = vadd.f32 %v215, %v216
    %v275 = vsub.f32 %v274, %v206
    %v276 = vsub.f32 %v275, %v207
    %v277 = vmul.f32 %v273, %v273
    %v278 = vmul.f32 %v276, %v276
    %v280 = vrot.slane %v278, 1
    %v282 = vadd.f32 %v277, %v280
    %v283 = vmul.f32 %v282, 0.25
    %v284 = vrcp.pop %v239
    %v285 = vmul.f32 %v231, %v284
    %vm286 = vcmp.lt.f32.partialorder %v285, 0.0
    %v287 = vsel %vm286, -1.0, 1.0
    %v288 = vand.u32 2147483647, %v285
    %vm289 = vcmp.gt.f32.partialorder %v288, 2.4142137
    %vm290 = vcmp.gt.f32.partialorder %v288, 0.41421357
    %v291 = vmax.f32 %v288, 1.0
    %v292 = vrcp.pop %v291
    %v293 = vmul.f32 -1.0, %v292
    %v294 = vsub.f32 %v288, 1.0
    %v295 = vadd.f32 %v288, 1.0
    %v296 = vrcp.pop %v295
    %v297 = vmul.f32 %v294, %v296
    %v298 = vsel %vm290, %v297, %v288
    %v299 = vsel %vm289, %v293, %v298
    %v300 = vsel %vm290, 0.7853982, 0.0
    %v301 = vsel %vm289, 1.5707964, %v300
    %v302 = vmul.f32 %v299, %v299
    %v303 = vmul.f32 %v302, 0.080537446
    %v304 = vsub.f32 %v303, 0.13877685
    %v305 = vmul.f32 %v304, %v302
    %v306 = vadd.f32 %v305, 0.19977711
    %v307 = vmul.f32 %v306, %v302
    %v308 = vsub.f32 %v307, 0.3333295
    %v309 = vmul.f32 %v308, %v302
    %v310 = vmul.f32 %v309, %v299
    %v311 = vadd.f32 %v310, %v299
    %v312 = vadd.f32 %v301, %v311
    %v313 = vmul.f32 %v287, %v312
    %v314 = vrcp.pop %v235
    %v315 = vmul.f32 %v229, %v314
    %vm316 = vcmp.lt.f32.partialorder %v315, 0.0
    %v317 = vsel %vm316, -1.0, 1.0
    %v318 = vand.u32 2147483647, %v315
    %vm319 = vcmp.gt.f32.partialorder %v318, 2.4142137
    %vm320 = vcmp.gt.f32.partialorder %v318, 0.41421357
    %v321 = vmax.f32 %v318, 1.0
    %v322 = vrcp.pop %v321
    %v323 = vmul.f32 -1.0, %v322
    %v324 = vsub.f32 %v318, 1.0
    %v325 = vadd.f32 %v318, 1.0
    %v326 = vrcp.pop %v325
    %v327 = vmul.f32 %v324, %v326
    %v328 = vsel %vm320, %v327, %v318
    %v329 = vsel %vm319, %v323, %v328
    %v330 = vsel %vm320, 0.7853982, 0.0
    %v331 = vsel %vm319, 1.5707964, %v330
    %v332 = vmul.f32 %v329, %v329
    %v333 = vmul.f32 %v332, 0.080537446
    %v334 = vsub.f32 %v333, 0.13877685
    %v335 = vmul.f32 %v334, %v332
    %v336 = vadd.f32 %v335, 0.19977711
    %v337 = vmul.f32 %v336, %v332
    %v338 = vsub.f32 %v337, 0.3333295
    %v339 = vmul.f32 %v338, %v332
    %v340 = vmul.f32 %v339, %v329
    %v341 = vadd.f32 %v340, %v329
    %v342 = vadd.f32 %v331, %v341
    %v343 = vmul.f32 %v317, %v342
    %v344 = vsub.f32 %v313, %v343
    %v345 = vmul.f32 %v344, 0.40528473
    %v346 = vmul.f32 %v345, %v344
    %v347 = vsub.f32 1.0, %v246
    %v348 = vadd.f32 %v347, %v346
    %v349 = vrcp.pop %v348
    %v350 = vmul.f32 %v346, %v349
    %v351 = vrcp.pop %v270
    %v352 = vmul.f32 %v283, %v351
    %v353 = vmul.f32 %v346, %v350
    %v354 = vadd.f32 %v352, %v353
    %v355 = vsub.f32 %v257, %v354
    %v356 = vsub.f32 1.0, %v355
    %v357 = vmul.f32 %v76, %v356
    %v358 = vsel %vm194, %v357, 0.0
    %359 = vadd.xlane.f32.xlu0 %v358
    %v360 = vpop.xlane.xlu0 %359
    %v361 = vrot.slane %v360, 4
    %v362 = vadd.f32 %v360, %v361
    %v363 = vrot.slane %v362, 2
    %v364 = vadd.f32 %v362, %v363
    %v365 = vrot.slane %v364, 1
    %v366 = vadd.f32 %v364, %v365
    %s367 = vtos %v366
    %v368 = vsub.f32 1.0, %v79
    %v369 = vsub.f32 1.0, %v80
    %v370 = vsub.f32 1.0, %v81
    %v371 = vmul.f32 %v368, %v65
    %v372 = vmul.f32 %v369, %v66
    %v373 = vmul.f32 %v370, %v67
    %v374 = vmul.f32 %v79, 4.0
    %v375 = vmul.f32 %v80, 4.0
    %v376 = vmul.f32 %v81, 4.0
    %v377 = vadd.f32 %v374, 1.0
    %v378 = vadd.f32 %v375, 1.0
    %v379 = vadd.f32 %v376, 1.0
    %v380 = vsub.f32 0.0, %v65
    %v381 = vsub.f32 0.0, %v66
    %v382 = vsub.f32 0.0, %v67
    %v383 = vmax.f32 %v380, 0.0
    %v384 = vmax.f32 %v381, 0.0
    %v385 = vmax.f32 %v382, 0.0
    %v386 = vand.u32 2147483647, %v65
    %v387 = vand.u32 2147483647, %v66
    %v388 = vand.u32 2147483647, %v67
    %v389 = vsub.f32 0.0, %v386
    %v390 = vsub.f32 0.0, %v387
    %v391 = vsub.f32 0.0, %v388
    %v392 = vmul.f32 %v389, 1.442695
    %v393 = vpow.pop %v392
    %v394 = vmul.f32 %v390, 1.442695
    %v395 = vpow.pop %v394
    %v396 = vmul.f32 %v391, 1.442695
    %v397 = vpow.pop %v396
    %v398 = vadd.f32 %v393, 1.0
    %v399 = vadd.f32 %v395, 1.0
    %v400 = vadd.f32 %v397, 1.0
    %v401 = vlog2.pop %v398
    %v402 = vmul.f32 %v401, 0.6931472
    %v403 = vlog2.pop %v399
    %v404 = vmul.f32 %v403, 0.6931472
    %v405 = vlog2.pop %v400
    %v406 = vmul.f32 %v405, 0.6931472
    %v407 = vadd.f32 %v383, %v402
    %v408 = vadd.f32 %v384, %v404
    %v409 = vadd.f32 %v385, %v406
    %v410 = vmul.f32 %v377, %v407
    %v411 = vmul.f32 %v378, %v408
    %v412 = vmul.f32 %v379, %v409
    %v413 = vadd.f32 %v371, %v410
    %v414 = vadd.f32 %v372, %v411
    %v415 = vadd.f32 %v373, %v412
    %v416 = vlaneseq
    %v417 = vshrl.u32 %v416, 7
    %v418 = vsub.s32 0, %v417
    %v419 = vrot.slane %v77, %v418
    %v420 = vmul.f32 %v419, %v413
    %v421 = vmul.f32 %v419, %v414
    %v422 = vmul.f32 %v419, %v415
    %v423 = vadd.f32 %v420, %v421
    %vm424 = vcmask 1043456
    %v425 = vsel %vm424, %v422, 0.0
    %v426 = vadd.f32 %v423, %v425
    %427 = vadd.xlane.f32.xlu0 %v426
    %v428 = vpop.xlane.xlu0 %427
    %v429 = vrot.slane %v428, 4
    %v430 = vadd.f32 %v428, %v429
    %v431 = vrot.slane %v430, 2
    %v432 = vadd.f32 %v430, %v431
    %v433 = vrot.slane %v432, 1
    %v434 = vadd.f32 %v432, %v433
    %s435 = vtos %v434
    %v436 = vmax.f32 %v355, 0.0
    %v437 = vmul.f32 %v78, %v436
    %v438 = vsub.f32 0.0, %v64
    %v439 = vmax.f32 %v438, 0.0
    %v440 = vand.u32 2147483647, %v64
    %v441 = vsub.f32 0.0, %v440
    %v442 = vmul.f32 %v441, 1.442695
    %v443 = vpow.pop %v442
    %v444 = vadd.f32 %v443, 1.0
    %v445 = vlog2.pop %v444
    %v446 = vmul.f32 %v445, 0.6931472
    %v447 = vadd.f32 %v439, %v446
    %v448 = vmul.f32 %v447, 9.0
    %v449 = vsub.f32 %v448, %v64
    %v450 = vmul.f32 %v437, %v449
    %v451 = vsel %vm194, %v450, 0.0
    %452 = vadd.xlane.f32.xlu0 %v451
    %v453 = vpop.xlane.xlu0 %452
    %v454 = vrot.slane %v453, 4
    %v455 = vadd.f32 %v453, %v454
    %v456 = vrot.slane %v455, 2
    %v457 = vadd.f32 %v455, %v456
    %v458 = vrot.slane %v457, 1
    %v459 = vadd.f32 %v457, %v458
    %s460 = vtos %v459
    %v461 = vlaneseq
    %v462 = vand.u32 %v461, 127
    %vm463 = vcmp.eq.s32.totalorder %v462, 0
    %v464 = vstv %s110
    %v465 = vsel %vm463, %v464, 0.0
    %vm466 = vcmp.eq.s32.totalorder %v462, 1
    %v467 = vstv %s204
    %v468 = vsel %vm466, %v467, 0.0
    %v469 = vadd.f32 %v465, %v468
    %vm470 = vcmp.eq.s32.totalorder %v462, 2
    %v471 = vstv %s367
    %v472 = vsel %vm470, %v471, 0.0
    %v473 = vadd.f32 %v469, %v472
    %vm474 = vcmp.eq.s32.totalorder %v462, 3
    %v475 = vstv %s435
    %v476 = vsel %vm474, %v475, 0.0
    %v477 = vadd.f32 %v473, %v476
    %vm478 = vcmp.eq.s32.totalorder %v462, 4
    %v479 = vstv %s460
    %v480 = vsel %vm478, %v479, 0.0
    %v481 = vadd.f32 %v477, %v480
    %v482 = vld [vmem:[#allocation8] sm:$0x1]
    %v483 = vadd.f32 %v482, %v481
    %vm484 = vcmask 57344
    %485 = vst.msk [vmem:[#allocation8] sm:$0x1] %vm484, %v483
    // Predicated region
    $region30: #{tpu_custom_call.1} parent=1 // pred_check
      _
    $region31: #{tpu_custom_call.1} parent=1 // pred_check_branch
      %487 = sbr.rel (0) target = $region33
    $region32: #{tpu_custom_call.1} parent=1 // pred_region
      %s489 = ssub.s32 16, 16
      %490 = vsyncadd [#allocation4], %s489
      %s492 = sshll.u32 [#allocation8], 4
      %s493 = int_to_ptr.vmem [resolvable:$true] %s492
      %495 = dma.vmem_to_hbm [thread:$0]  %s493, 16, %s3, [#allocation4]
    $region33: #{tpu_custom_call.1} parent=1 // pred_fallthru
      _
    // Predicated region
    $region34: #{tpu_custom_call.1} parent=1 // pred_check
      _
    $region35: #{tpu_custom_call.1} parent=1 // pred_check_branch
      %497 = sbr.rel (0) target = $region37
    $region36: #{tpu_custom_call.1} parent=1 // pred_region
      %498 = dma.done [#allocation4], 16
    $region37: #{tpu_custom_call.1} parent=1 // pred_fallthru
      _
    %499 = vsyncpa [#allocation3], 1
    %500 = vsyncpa [#allocation6], 1
    %501 = vsyncpa [#allocation4], 1

</llo_original>
